<compile_context>
chip_gen: v7x
topology: tpu7x:2x2x1
jax: 0.10.0
libtpu: 0.0.40
codegen_flags: <defaults>
</compile_context>

<pallas_src>
import functools

import jax
import jax.numpy as jnp
from jax import lax
from jax.experimental import pallas as pl
from jax.experimental.pallas import tpu as pltpu


def _focal_ce_kernel(logits_ref, target_ref, out_ref, acc_ref, ids_ref, *,
                     n_total: int, block_rows: int, tiles_per_chunk: int,
                     needs_mask: bool):
    # logits_ref: [TN, C]     native dtype, VMEM (streamed tile)
    # target_ref: [TN, 1]     int32, VMEM
    # out_ref:    [1, 8, 128] f32 — per-chunk CE partial sum (broadcast), written at last step
    # acc_ref:    (1, 1)      f32 VMEM scratch — running CE sum of this batch chunk
    # ids_ref:    (TN, C)     int32 VMEM scratch — class-id iota, built once per chunk
    j = pl.program_id(1)

    @pl.when(j == 0)
    def _():
        acc_ref[...] = jnp.zeros_like(acc_ref)
        ids_ref[...] = lax.broadcasted_iota(jnp.int32, ids_ref.shape, 1)

    x = logits_ref[...].astype(jnp.float32)          # [TN, C], f32 math on-chip
    tgt = target_ref[...]                            # [TN, 1] int32
    tn, c = x.shape

    # Numerically stable log-sum-exp over classes (lane axis).
    m = jnp.max(x, axis=-1, keepdims=True)                                   # [TN, 1]
    e = jnp.exp(x - m)                                                       # [TN, C]
    lse = m + jnp.log(jnp.sum(e, axis=-1, keepdims=True))                    # [TN, 1]

    # Target-class logit via compare + select against the hoisted class-id iota.
    tgt_logit = jnp.sum(jnp.where(ids_ref[...] == tgt, x, 0.0),
                        axis=-1, keepdims=True)                              # [TN, 1]

    per_sample_ce = lse - tgt_logit                                          # [TN, 1]

    if needs_mask:
        # Mask rows past the true batch size (ragged last tile / clamped overflow tile).
        # Must stay a select (jnp.where), not a multiply: padded rows may hold inf/NaN.
        p_idx = pl.program_id(0)
        tile_idx = p_idx * tiles_per_chunk + j
        row_ids = tile_idx * block_rows + lax.broadcasted_iota(jnp.int32, (tn, 1), 0)
        per_sample_ce = jnp.where(row_ids < n_total, per_sample_ce, 0.0)

    acc_ref[...] += jnp.sum(per_sample_ce, axis=0, keepdims=True)            # (1, 1)

    @pl.when(j == pl.num_programs(1) - 1)
    def _():
        # Lane-dense output block: chunk partial sum broadcast into (1, 8, 128).
        out_ref[...] = jnp.zeros_like(out_ref) + acc_ref[...]


def focal_loss(logits: jax.Array, target: jax.Array, *, gamma: float = 0.0,
               eps: float = 1e-7, block_rows: int | None = None) -> jax.Array:
    """Pallas TPU implementation of FocalLoss.forward.

    logits: [N, C] (any float dtype, streamed natively); target: [N] int class indices.
    Returns a scalar float32. (`eps` is unused, matching the PyTorch forward.)
    """
    n, c = logits.shape
    itemsize = jnp.dtype(logits.dtype).itemsize
    row_align = max(8, 32 // max(1, itemsize))       # 8 for f32, 16 for bf16, 32 for 8-bit

    try:
        vmem_phys = int(pltpu.get_tpu_info().vmem_capacity_bytes)
    except Exception:                                 # pragma: no cover - conservative fallback
        vmem_phys = 64 * 1024 * 1024                  # v7x-sized (smallest generation)

    if block_rows is None:
        # Budget the full per-row working set: 2x double-buffered streamed (logits + target),
        # the int32 iota scratch, and ~4 live f32 dense temporaries (cast, exp, select, ...).
        budget = int(vmem_phys * 0.60)
        bytes_per_row = 2 * (c * itemsize + 4) + 5 * c * 4
        block_rows = budget // bytes_per_row
        block_rows = max(row_align, min(block_rows, 32768))
    block_rows = max(row_align, (block_rows // row_align) * row_align)

    tn = n if n <= block_rows else block_rows         # full dim if small, else aligned tile
    num_tiles = pl.cdiv(n, tn)
    num_chunks = 2 if num_tiles >= 2 else 1           # v7x dual-TC split; plain loop elsewhere
    tiles_per_chunk = pl.cdiv(num_tiles, num_chunks)
    needs_mask = (n % tn != 0) or (num_chunks * tiles_per_chunk != num_tiles)

    last_tile = num_tiles - 1
    if num_chunks * tiles_per_chunk == num_tiles:
        def row_block(p, j):
            return (p * tiles_per_chunk + j, 0)
    else:
        def row_block(p, j):
            # Clamp the overflow step of the last chunk to a valid tile; its rows are
            # fully masked in-kernel (global row index >= n).
            return (jnp.minimum(p * tiles_per_chunk + j, last_tile), 0)

    target2d = target.astype(jnp.int32).reshape(n, 1)

    est_bytes = 2 * tn * (c * itemsize + 4) + 5 * tn * c * 4 + (2 << 20)
    vmem_limit = int(min(vmem_phys * 3 // 4, max(32 << 20, est_bytes)))

    cost = pl.CostEstimate(
        flops=8 * n * c,
        transcendentals=n * c + n,
        bytes_accessed=n * c * itemsize + n * 4 + num_chunks * 8 * 128 * 4,
    )

    partials = pl.pallas_call(
        functools.partial(_focal_ce_kernel, n_total=n, block_rows=tn,
                          tiles_per_chunk=tiles_per_chunk, needs_mask=needs_mask),
        out_shape=jax.ShapeDtypeStruct((num_chunks, 8, 128), jnp.float32),
        grid_spec=pltpu.PrefetchScalarGridSpec(
            num_scalar_prefetch=0,
            grid=(num_chunks, tiles_per_chunk),
            in_specs=[
                pl.BlockSpec((tn, c), row_block),
                pl.BlockSpec((tn, 1), row_block),
            ],
            out_specs=pl.BlockSpec((1, 8, 128), lambda p, j: (p, 0, 0)),
            scratch_shapes=[
                pltpu.VMEM((1, 1), jnp.float32),      # running CE sum per chunk
                pltpu.VMEM((tn, c), jnp.int32),       # hoisted class-id iota
            ],
        ),
        compiler_params=pltpu.CompilerParams(
            dimension_semantics=("parallel", "arbitrary"),   # chunks parallel, CE reduction last
            vmem_limit_bytes=vmem_limit,
        ),
        cost_estimate=cost,
    )(logits, target2d)

    # Tiny scalar epilogue in the wrapper: combine chunk partials, mean, focal transform.
    ce = jnp.sum(partials[:, 0, 0]) / n
    p = jnp.exp(-ce)
    return (1.0 - p) ** jnp.float32(gamma) * ce


def _focal_loss_ref(logits, target, gamma=0.0):
    # Pure-JAX reference for sanity checking.
    logp_all = jax.nn.log_softmax(logits.astype(jnp.float32), axis=-1)
    nll = -jnp.take_along_axis(logp_all, target[:, None], axis=-1)[:, 0]
    ce = jnp.mean(nll)
    p = jnp.exp(-ce)
    return (1.0 - p) ** gamma * ce


if __name__ == "__main__":
    key = jax.random.PRNGKey(0)
    N, C = 20, 128          # 20 samples, 128 classes
    GAMMA = 2.0

    k1, k2 = jax.random.split(key)
    logits = jax.random.normal(k1, (N, C), dtype=jnp.float32)
    target = jax.random.randint(k2, (N,), 0, C, dtype=jnp.int32)

    # Forced-small-tile path: exercises the 2-chunk parallel grid, the clamped overflow tile,
    # and the ragged-row masking (num_tiles=3, chunks=2, last logical tile fully masked).
    loss = jax.block_until_ready(focal_loss(logits, target, gamma=GAMMA, block_rows=8))
    ref = jax.block_until_ready(_focal_loss_ref(logits, target, gamma=GAMMA))
    assert jnp.allclose(loss, ref, rtol=1e-5, atol=1e-5), (loss, ref)

    # Native-dtype streaming path (bf16 logits, auto tile sizing -> single-tile grid).
    logits_bf16 = logits.astype(jnp.bfloat16)
    loss_bf16 = jax.block_until_ready(focal_loss(logits_bf16, target, gamma=GAMMA))
    ref_bf16 = jax.block_until_ready(_focal_loss_ref(logits_bf16, target, gamma=GAMMA))
    assert jnp.allclose(loss_bf16, ref_bf16, rtol=2e-2, atol=2e-2), (loss_bf16, ref_bf16)

    print("KERNEL_OK")
</pallas_src>

<mosaic_0001>
module attributes {stable_mosaic.version = 11 : i64} {
  func.func @_focal_ce_kernel(%arg0: i32, %arg1: i32, %arg2: memref<8x128xf32, #tpu.memory_space<vmem>>, %arg3: memref<8x1xi32, #tpu.memory_space<vmem>>, %arg4: memref<1x8x128xf32, #tpu.memory_space<vmem>>, %arg5: memref<1x1xf32, #tpu.memory_space<vmem>>, %arg6: memref<8x128xi32, #tpu.memory_space<vmem>>) attributes {dimension_semantics = [#tpu.dimension_semantics<parallel>, #tpu.dimension_semantics<arbitrary>], iteration_bounds = array<i64: 2, 2>, scalar_prefetch = 0 : i64, scratch_operands = 2 : i64, tpu.core_type = #tpu.core_type<tc>, window_params = [{transform_indices = @transform_0, window_bounds = array<i64: 8, 128>}, {transform_indices = @transform_1, window_bounds = array<i64: 8, 1>}, {transform_indices = @transform_2, window_bounds = array<i64: 1, 8, 128>}]} {
    %c0_i32 = arith.constant 0 : i32
    %0 = arith.cmpi eq, %arg1, %c0_i32 : i32
    %1 = arith.extui %0 : i1 to i32
    %c0_i32_0 = arith.constant 0 : i32
    %2 = arith.cmpi ne, %1, %c0_i32_0 : i32
    scf.if %2 {
      %cst_16 = arith.constant 0.000000e+00 : f32
      %40 = vector.broadcast %cst_16 : f32 to vector<1x1xf32>
      %c0_17 = arith.constant 0 : index
      %c0_18 = arith.constant 0 : index
      %41 = vector.load %arg5[%c0_17, %c0_18] : memref<1x1xf32, #tpu.memory_space<vmem>>, vector<1x1xf32>
      tpu.vector_store %arg5[%c0_17, %c0_18], %40 {strides = array<i32>} : memref<1x1xf32, #tpu.memory_space<vmem>>, vector<1x1xf32>,
      %42 = tpu.iota {dimensions = array<i32: 1>} : vector<8x128xi32>
      %c0_19 = arith.constant 0 : index
      %c0_20 = arith.constant 0 : index
      %43 = vector.load %arg6[%c0_19, %c0_20] : memref<8x128xi32, #tpu.memory_space<vmem>>, vector<8x128xi32>
      tpu.vector_store %arg6[%c0_19, %c0_20], %42 {strides = array<i32>} : memref<8x128xi32, #tpu.memory_space<vmem>>, vector<8x128xi32>,
    } else {
    }
    %c0 = arith.constant 0 : index
    %c0_1 = arith.constant 0 : index
    %3 = vector.load %arg2[%c0, %c0_1] : memref<8x128xf32, #tpu.memory_space<vmem>>, vector<8x128xf32>
    %c0_2 = arith.constant 0 : index
    %c0_3 = arith.constant 0 : index
    %4 = vector.load %arg3[%c0_2, %c0_3] : memref<8x1xi32, #tpu.memory_space<vmem>>, vector<8x1xi32>
    %cst = arith.constant dense<0xFF800000> : vector<8xf32>
    %5 = vector.multi_reduction <maximumf>, %3, %cst [1] : vector<8x128xf32> to vector<8xf32>
    %6 = vector.shape_cast %5 : vector<8xf32> to vector<8x1xf32>
    %7 = vector.broadcast %6 : vector<8x1xf32> to vector<8x128xf32>
    %8 = arith.subf %3, %7 : vector<8x128xf32>
    %9 = math.exp %8 : vector<8x128xf32>
    %cst_4 = arith.constant dense<0.000000e+00> : vector<8xf32>
    %10 = vector.multi_reduction <add>, %9, %cst_4 [1] : vector<8x128xf32> to vector<8xf32>
    %11 = vector.shape_cast %10 : vector<8xf32> to vector<8x1xf32>
    %12 = math.log %11 : vector<8x1xf32>
    %13 = arith.addf %6, %12 : vector<8x1xf32>
    %c0_5 = arith.constant 0 : index
    %c0_6 = arith.constant 0 : index
    %14 = vector.load %arg6[%c0_5, %c0_6] : memref<8x128xi32, #tpu.memory_space<vmem>>, vector<8x128xi32>
    %15 = vector.broadcast %4 : vector<8x1xi32> to vector<8x128xi32>
    %16 = arith.cmpi eq, %14, %15 : vector<8x128xi32>
    %cst_7 = arith.constant 0.000000e+00 : f32
    %17 = vector.broadcast %cst_7 : f32 to vector<8x128xf32>
    %18 = arith.select %16, %3, %17 : vector<8x128xi1>, vector<8x128xf32>
    %cst_8 = arith.constant dense<0.000000e+00> : vector<8xf32>
    %19 = vector.multi_reduction <add>, %18, %cst_8 [1] : vector<8x128xf32> to vector<8xf32>
    %20 = vector.shape_cast %19 : vector<8xf32> to vector<8x1xf32>
    %21 = arith.subf %13, %20 : vector<8x1xf32>
    %c2_i32 = arith.constant 2 : i32
    %22 = arith.muli %arg0, %c2_i32 : i32
    %23 = arith.addi %22, %arg1 : i32
    %c8_i32 = arith.constant 8 : i32
    %24 = arith.muli %23, %c8_i32 : i32
    %25 = tpu.iota {dimensions = array<i32: 0>} : vector<8x1xi32>
    %26 = vector.broadcast %24 : i32 to vector<8x1xi32>
    %27 = arith.addi %26, %25 : vector<8x1xi32>
    %c20_i32 = arith.constant 20 : i32
    %28 = vector.broadcast %c20_i32 : i32 to vector<8x1xi32>
    %29 = arith.cmpi slt, %27, %28 : vector<8x1xi32>
    %cst_9 = arith.constant 0.000000e+00 : f32
    %30 = vector.broadcast %cst_9 : f32 to vector<8x1xf32>
    %31 = arith.select %29, %21, %30 : vector<8x1xi1>, vector<8x1xf32>
    %c0_10 = arith.constant 0 : index
    %c0_11 = arith.constant 0 : index
    %32 = vector.load %arg5[%c0_10, %c0_11] : memref<1x1xf32, #tpu.memory_space<vmem>>, vector<1x1xf32>
    %cst_12 = arith.constant dense<0.000000e+00> : vector<1xf32>
    %33 = vector.multi_reduction <add>, %31, %cst_12 [0] : vector<8x1xf32> to vector<1xf32>
    %34 = vector.shape_cast %33 : vector<1xf32> to vector<1x1xf32>
    %35 = arith.addf %32, %34 : vector<1x1xf32>
    %c0_13 = arith.constant 0 : index
    %c0_14 = arith.constant 0 : index
    %36 = vector.load %arg5[%c0_13, %c0_14] : memref<1x1xf32, #tpu.memory_space<vmem>>, vector<1x1xf32>
    tpu.vector_store %arg5[%c0_13, %c0_14], %35 {strides = array<i32>} : memref<1x1xf32, #tpu.memory_space<vmem>>, vector<1x1xf32>,
    %c1_i32 = arith.constant 1 : i32
    %37 = arith.cmpi eq, %arg1, %c1_i32 : i32
    %38 = arith.extui %37 : i1 to i32
    %c0_i32_15 = arith.constant 0 : i32
    %39 = arith.cmpi ne, %38, %c0_i32_15 : i32
    scf.if %39 {
      %cst_16 = arith.constant 0.000000e+00 : f32
      %40 = vector.broadcast %cst_16 : f32 to vector<1x8x128xf32>
      %c0_17 = arith.constant 0 : index
      %c0_18 = arith.constant 0 : index
      %41 = vector.load %arg5[%c0_17, %c0_18] : memref<1x1xf32, #tpu.memory_space<vmem>>, vector<1x1xf32>
      %42 = vector.shape_cast %41 : vector<1x1xf32> to vector<1x1x1xf32>
      %43 = vector.broadcast %42 : vector<1x1x1xf32> to vector<1x8x128xf32>
      %44 = arith.addf %40, %43 : vector<1x8x128xf32>
      %c0_19 = arith.constant 0 : index
      %c0_20 = arith.constant 0 : index
      %c0_21 = arith.constant 0 : index
      %45 = vector.load %arg4[%c0_19, %c0_20, %c0_21] : memref<1x8x128xf32, #tpu.memory_space<vmem>>, vector<1x8x128xf32>
      tpu.vector_store %arg4[%c0_19, %c0_20, %c0_21], %44 {strides = array<i32>} : memref<1x8x128xf32, #tpu.memory_space<vmem>>, vector<1x8x128xf32>,
    } else {
    }
    return
  }
  func.func @transform_0(%arg0: i32, %arg1: i32) -> (i32, i32) {
    %c2_i32 = arith.constant 2 : i32
    %0 = arith.muli %arg0, %c2_i32 : i32
    %1 = arith.addi %0, %arg1 : i32
    %c2_i32_0 = arith.constant 2 : i32
    %2 = arith.minsi %1, %c2_i32_0 : i32
    %c0_i32 = arith.constant 0 : i32
    %c0_i32_1 = arith.constant 0 : i32
    return %2, %c0_i32 : i32, i32
  }
  func.func @transform_1(%arg0: i32, %arg1: i32) -> (i32, i32) {
    %c2_i32 = arith.constant 2 : i32
    %0 = arith.muli %arg0, %c2_i32 : i32
    %1 = arith.addi %0, %arg1 : i32
    %c2_i32_0 = arith.constant 2 : i32
    %2 = arith.minsi %1, %c2_i32_0 : i32
    %c0_i32 = arith.constant 0 : i32
    %c0_i32_1 = arith.constant 0 : i32
    return %2, %c0_i32 : i32, i32
  }
  func.func @transform_2(%arg0: i32, %arg1: i32) -> (i32, i32, i32) {
    %c0_i32 = arith.constant 0 : i32
    %c0_i32_0 = arith.constant 0 : i32
    %c0_i32_1 = arith.constant 0 : i32
    return %arg0, %c0_i32, %c0_i32_0 : i32, i32, i32
  }
}

</mosaic_0001>

<llo_original>
// kernel: tpu_custom_call.1
$region0: #{tpu_custom_call.1}
  #allocation0 [shape = 'u32[]', space=smem, size = 0x4, offset = 0x4, fixed_abs, tag = 'smem constant byte address 0x4 - core index']
  #allocation1 [shape = 'u32[144,128]{1,0:T(1,128)}', space=vmem, size = 0x12000, scoped, tag = 'internal scratch']
  #allocation2 [shape = 'f32[1,1]{1,0:T(1,128)}', space=vmem, size = 0x200, scoped, tag = 'scratch operand']
  #allocation3 [shape = 's32[8,128]{1,0:T(8,128)}', space=vmem, size = 0x1000, scoped, tag = 'scratch operand']
  %s0 = inlined_call_operand.vmem [shape: f32[20,128], index: 0, kind: input, shape index: {}]
  %s1 = inlined_call_operand.vmem [shape: s32[20,1], index: 1, kind: input, shape index: {}]
  %s2 = inlined_call_operand.hbm [shape: f32[2,8,128], index: 2, kind: output, shape index: {}]
  %s3 = sld [smem:[#allocation0]]
  $region49: #{tpu_custom_call.1} parent=0
    _
  %s5 = ssub.s32 1, %s3
  %s6 = scalar_select 0, %s5, %s3
  $region1: #{tpu_custom_call.1} parent=0
    #allocation4 [shape = 'u8[8192]{0}', space=vmem, size = 0x2000, scoped, tag = 'output window, operand 0']
    #allocation5 [shape = 's32[2]{0}', space=sflag, size = 0x8, scoped, tag = 'scoped memory for tpu_custom_call.1']
    %7 = vsyncpa [#allocation5], 0
    %s8 = scalar_lea.sflag [#allocation5], 1
    %9 = vsyncpa %s8, 0
    loop: start=0, step=1, limit=6
    $region2: #{tpu_custom_call.1} parent=1 // loop_pre_header
      _
    $region3: #{tpu_custom_call.1} parent=1 // loop_header
      %s11 = sphi 0, %s15
      %p12 = scmp.ge.s32.totalorder %s11, 6
      %s18 = sphi 0, %s30
      %s19 = sphi 0, %s26
      %s20 = sphi 0, %s18
      %s21 = sphi 0, %s19
      %s22 = sphi 0, %s20
      %s23 = sphi 0, %s21
      %s41 = sphi 0, %s43
      %s44 = sphi 0, %s41
      %s45 = sphi 0, %s44
      %s61 = sphi 0, %s45
      %s75 = sphi 0, %s77
      %s78 = sphi 0, %s75
      %s79 = sphi 0, %s78
      %s95 = sphi 0, %s79
      %s101 = sphi 0, %s103
      %s104 = sphi 0, %s101
      %s105 = sphi 0, %s104
      %s121 = sphi 0, %s105
    $region4: #{tpu_custom_call.1} parent=1 // loop_header_branch
      %14 = sbr.rel (%p12) target = $region8
    $region5: #{tpu_custom_call.1} parent=1 // loop_body
      %s16 = ssub.s32 %s11, 1
      %s17 = ssub.s32 %s11, 2
      %s24 = sadd.s32 1, %s19
      %p25 = scmp.ge.s32.totalorder %s24, 2
      %s26 = scalar_select %p25, 0, %s24
      %s27 = sadd.s32 1, %s18
      %s28 = scalar_select %p25, %s27, %s18
      %p29 = scmp.ge.s32.totalorder %s28, 2
      %s30 = scalar_select %p29, 0, %s28
      %s31 = smul.u32 %s18, 2
      %s32 = sadd.s32 %s31, %s19
      %p33 = scmp.lt.s32.totalorder %s32, 2
      %s34 = scalar_select %p33, %s32, 2
      %s35 = smul.u32 %s30, 2
      %s36 = sadd.s32 %s35, %s26
      %p37 = scmp.lt.s32.totalorder %s36, 2
      %s38 = scalar_select %p37, %s36, 2
      %s39 = ssub.s32 %s34, %s38
      %p40 = scmp.eq.s32.totalorder %s39, 0
      %s42 = sadd.s32 %s41, 1
      %s43 = scalar_select %p40, %s41, %s42
      %p46 = pneg %p40
      %p47 = scmp.eq.s32.totalorder %s11, 3
      %p48 = por %p46, %p47
      %p49 = scmp.ne.s32.totalorder %s41, %s44
      %p50 = scmp.eq.s32.totalorder %s11, 0
      %p51 = por %p49, %p50
      %p52 = scmp.ne.s32.totalorder %s41, %s44
      %p53 = scmp.eq.s32.totalorder %s16, 3
      %p54 = por %p52, %p53
      %p55 = scmp.ne.s32.totalorder %s44, %s45
      %p56 = scmp.eq.s32.totalorder %s16, 0
      %p57 = por %p55, %p56
      %p58 = scmp.ne.s32.totalorder %s44, %s45
      %p59 = scmp.eq.s32.totalorder %s17, 3
      %p60 = por %p58, %p59
      %p62 = scmp.ne.s32.totalorder %s45, %s61
      %p63 = scmp.eq.s32.totalorder %s17, 0
      %p64 = por %p62, %p63
      %s65 = smul.u32 %s18, 2
      %s66 = sadd.s32 %s65, %s19
      %p67 = scmp.lt.s32.totalorder %s66, 2
      %s68 = scalar_select %p67, %s66, 2
      %s69 = smul.u32 %s30, 2
      %s70 = sadd.s32 %s69, %s26
      %p71 = scmp.lt.s32.totalorder %s70, 2
      %s72 = scalar_select %p71, %s70, 2
      %s73 = ssub.s32 %s68, %s72
      %p74 = scmp.eq.s32.totalorder %s73, 0
      %s76 = sadd.s32 %s75, 1
      %s77 = scalar_select %p74, %s75, %s76
      %p80 = pneg %p74
      %p81 = scmp.eq.s32.totalorder %s11, 3
      %p82 = por %p80, %p81
      %p83 = scmp.ne.s32.totalorder %s75, %s78
      %p84 = scmp.eq.s32.totalorder %s11, 0
      %p85 = por %p83, %p84
      %p86 = scmp.ne.s32.totalorder %s75, %s78
      %p87 = scmp.eq.s32.totalorder %s16, 3
      %p88 = por %p86, %p87
      %p89 = scmp.ne.s32.totalorder %s78, %s79
      %p90 = scmp.eq.s32.totalorder %s16, 0
      %p91 = por %p89, %p90
      %p92 = scmp.ne.s32.totalorder %s78, %s79
      %p93 = scmp.eq.s32.totalorder %s17, 3
      %p94 = por %p92, %p93
      %p96 = scmp.ne.s32.totalorder %s79, %s95
      %p97 = scmp.eq.s32.totalorder %s17, 0
      %p98 = por %p96, %p97
      %s99 = ssub.s32 %s18, %s30
      %p100 = scmp.eq.s32.totalorder %s99, 0
      %s102 = sadd.s32 %s101, 1
      %s103 = scalar_select %p100, %s101, %s102
      %p106 = pneg %p100
      %p107 = scmp.eq.s32.totalorder %s11, 3
      %p108 = por %p106, %p107
      %p109 = scmp.ne.s32.totalorder %s101, %s104
      %p110 = scmp.eq.s32.totalorder %s11, 0
      %p111 = por %p109, %p110
      %p112 = scmp.ne.s32.totalorder %s101, %s104
      %p113 = scmp.eq.s32.totalorder %s16, 3
      %p114 = por %p112, %p113
      %p115 = scmp.ne.s32.totalorder %s104, %s105
      %p116 = scmp.eq.s32.totalorder %s16, 0
      %p117 = por %p115, %p116
      %p118 = scmp.ne.s32.totalorder %s104, %s105
      %p119 = scmp.eq.s32.totalorder %s17, 3
      %p120 = por %p118, %p119
      %p122 = scmp.ne.s32.totalorder %s105, %s121
      %p123 = scmp.eq.s32.totalorder %s17, 0
      %p124 = por %p122, %p123
      %p125 = scmp.le.s32.totalorder 1, %s11
      %p126 = scmp.lt.s32.totalorder %s11, 5
      %p127 = pnand %p125, %p126
      %p128 = pneg %p127
      // Predicated region
      $region9: #{tpu_custom_call.1} parent=5 // pred_check
        _
      $region10: #{tpu_custom_call.1} parent=5 // pred_check_branch
        %130 = sbr.rel (%p127) target = $region12
      $region11: #{tpu_custom_call.1} parent=5 // pred_region
        %s131 = ssub.s32 %s11, 1
      $region12: #{tpu_custom_call.1} parent=5 // pred_fallthru
        _
      %p132 = scmp.lt.s32.totalorder %s11, 4
      // Predicated region
      $region13: #{tpu_custom_call.1} parent=5 // pred_check
        %p133 = pneg %p132
      $region14: #{tpu_custom_call.1} parent=5 // pred_check_branch
        %135 = sbr.rel (%p133) target = $region16
      $region15: #{tpu_custom_call.1} parent=5 // pred_region
        // Predicated region
        $region17: #{tpu_custom_call.1} parent=15 // pred_check
          %p136 = pneg %p51
        $region18: #{tpu_custom_call.1} parent=15 // pred_check_branch
          %138 = sbr.rel (%p136) target = $region20
        $region19: #{tpu_custom_call.1} parent=15 // pred_region
          %s139 = smul.u32 %s18, 2
          %s140 = sadd.s32 %s139, %s19
          %p141 = scmp.lt.s32.totalorder %s140, 2
          %s142 = scalar_select %p141, %s140, 2
          %p143 = scmp.lt.s32.totalorder %s142, 2
          %s144 = scalar_select %p143, %s142, 2
          %s145 = smul.addr %s144, 8
          %s146 = scalar_lea.vmem %s0, %s145
          %s147 = smul.u32 %s18, 2
          %s148 = sadd.s32 %s147, %s19
          %p149 = scmp.lt.s32.totalorder %s148, 2
          %s150 = scalar_select %p149, %s148, 2
        $region20: #{tpu_custom_call.1} parent=15 // pred_fallthru
          _
        // Predicated region
        $region21: #{tpu_custom_call.1} parent=15 // pred_check
          %p151 = pneg %p85
        $region22: #{tpu_custom_call.1} parent=15 // pred_check_branch
          %153 = sbr.rel (%p151) target = $region24
        $region23: #{tpu_custom_call.1} parent=15 // pred_region
          %s154 = smul.u32 %s18, 2
          %s155 = sadd.s32 %s154, %s19
          %p156 = scmp.lt.s32.totalorder %s155, 2
          %s157 = scalar_select %p156, %s155, 2
          %p158 = scmp.lt.s32.totalorder %s157, 2
          %s159 = scalar_select %p158, %s157, 2
          %s160 = smul.addr %s159, 8
          %s161 = scalar_lea.vmem %s1, %s160
          %s162 = smul.u32 %s18, 2
          %s163 = sadd.s32 %s162, %s19
          %p164 = scmp.lt.s32.totalorder %s163, 2
          %s165 = scalar_select %p164, %s163, 2
        $region24: #{tpu_custom_call.1} parent=15 // pred_fallthru
          _
      $region16: #{tpu_custom_call.1} parent=5 // pred_fallthru
        _
      %p166 = scmp.le.s32.totalorder 1, %s11
      %p167 = scmp.lt.s32.totalorder %s11, 5
      %p168 = pnand %p166, %p167
      %p169 = pneg %p168
      // Predicated region
      $region25: #{tpu_custom_call.1} parent=5 // pred_check
        _
      $region26: #{tpu_custom_call.1} parent=5 // pred_check_branch
        %171 = sbr.rel (%p168) target = $region28
      $region27: #{tpu_custom_call.1} parent=5 // pred_region
        %s172 = ssub.s32 %s11, 1
        %s173 = smul.u32 %s20, 2
        %s174 = sadd.s32 %s173, %s21
        %p175 = scmp.lt.s32.totalorder %s174, 2
        %s176 = scalar_select %p175, %s174, 2
        %p177 = scmp.lt.s32.totalorder %s176, 2
        %s178 = scalar_select %p177, %s176, 2
        %s179 = smul.addr %s178, 8
        %s180 = scalar_lea.vmem %s0, %s179
        %p181 = pneg %p57
        %p182 = pneg %p54
        %s183 = smul.u32 %s20, 2
        %s184 = sadd.s32 %s183, %s21
        %p185 = scmp.lt.s32.totalorder %s184, 2
        %s186 = scalar_select %p185, %s184, 2
        %p187 = scmp.lt.s32.totalorder %s186, 2
        %s188 = scalar_select %p187, %s186, 2
        %s189 = smul.addr %s188, 8
        %s190 = scalar_lea.vmem %s1, %s189
        %p191 = pneg %p91
        %p192 = pneg %p88
        %p193 = pneg %p117
        %p194 = pneg %p114
        %s195 = sand.u32 %s104, 1
        %s196 = scalar_lea.sflag [#allocation5], %s195
        %s197 = sand.u32 %s104, 1
        %s198 = smul.addr %s197, 8
        %s199 = scalar_lea.vmem [#allocation4], %s198
        %s200 = smul.u32 %s20, 2
        %s201 = sadd.s32 %s200, %s21
        %p202 = scmp.lt.s32.totalorder %s201, 2
        %s203 = scalar_select %p202, %s201, 2
        %p204 = scmp.lt.s32.totalorder %s203, 2
        %s205 = scalar_select %p204, %s203, 2
        %s206 = smul.addr %s205, 8
        %s207 = scalar_lea.vmem %s0, %s206
        %s208 = smul.u32 %s20, 2
        %s209 = sadd.s32 %s208, %s21
        %p210 = scmp.lt.s32.totalorder %s209, 2
        %s211 = scalar_select %p210, %s209, 2
        %s212 = smul.u32 %s20, 2
        %s213 = sadd.s32 %s212, %s21
        %p214 = scmp.lt.s32.totalorder %s213, 2
        %s215 = scalar_select %p214, %s213, 2
        %p216 = scmp.lt.s32.totalorder %s215, 2
        %s217 = scalar_select %p216, %s215, 2
        %s218 = smul.addr %s217, 8
        %s219 = scalar_lea.vmem %s1, %s218
        %s220 = smul.u32 %s20, 2
        %s221 = sadd.s32 %s220, %s21
        %p222 = scmp.lt.s32.totalorder %s221, 2
        %s223 = scalar_select %p222, %s221, 2
        %p224 = scmp.eq.s32.totalorder %s21, 0
        // Predicated region
        $region29: #{tpu_custom_call.1} parent=27 // pred_check
          %p225 = pneg %p224
        $region30: #{tpu_custom_call.1} parent=27 // pred_check_branch
          %227 = sbr.rel (%p225) target = $region32
        $region31: #{tpu_custom_call.1} parent=27 // pred_region
          %vm228 = vcmask 0
          %229 = vst.msk [vmem:[#allocation2] sm:$0x1] %vm228, 0.0
          %v230 = vlaneseq
          %v231 = vand.u32 %v230, 127
          %232 = vst [vmem:[#allocation3] sm:$0xff] %v231
        $region32: #{tpu_custom_call.1} parent=27 // pred_fallthru
          _
        %v233 = vld [vmem:[%s207] sm:$0xff]
        %v234 = vld [vmem:[%s219] sm:$0xff]
        %235 = vmax.xlane.f32.xlu0 %v233
        %v236 = vpop.xlane.xlu0 %235
        %v237 = vsub.f32 %v233, %v236
        %v238 = vmul.f32 %v237, 1.442695
        %v239 = vpow.pop %v238
        %240 = vadd.xlane.f32.xlu0 %v239
        %v241 = vpop.xlane.xlu0 %240
        %v242 = vlog2.pop %v241
        %v243 = vmul.f32 %v242, 0.6931472
        %v244 = vadd.f32 %v236, %v243
        %v245 = vld [vmem:[#allocation3] sm:$0xff]
        %246 = vset.pattern.permute.xlu0 0
        %247 = vperm.xlu0 %246, %v234
        %v248 = vpop.permute.xlu0 %247
        %vm249 = vcmp.eq.s32.totalorder %v245, %v248
        %v250 = vsel %vm249, %v233, 0.0
        %251 = vadd.xlane.f32.xlu0 %v250
        %v252 = vpop.xlane.xlu0 %251
        %v253 = vsub.f32 %v244, %v252
        %s254 = smul.u32 %s20, 2
        %s255 = sadd.s32 %s254, %s21
        %s256 = smul.u32 %s255, 8
        %v257 = vlaneseq
        %v258 = vshrl.u32 %v257, 7
        %v259 = vstv %s256
        %v260 = vadd.s32 %v259, %v258
        %vm261 = vcmp.lt.s32.totalorder %v260, 20
        %v262 = vsel %vm261, %v253, 0.0
        %v263 = vld [vmem:[#allocation2] sm:$0x1]
        %v264 = vrot.slane %v262, 4
        %v265 = vadd.f32 %v262, %v264
        %v266 = vrot.slane %v265, 2
        %v267 = vadd.f32 %v265, %v266
        %v268 = vrot.slane %v267, 1
        %v269 = vadd.f32 %v267, %v268
        %v270 = vadd.f32 %v263, %v269
        %vm271 = vcmask 0
        %272 = vst.msk [vmem:[#allocation2] sm:$0x1] %vm271, %v270
        %p273 = scmp.eq.s32.totalorder %s21, 1
        // Predicated region
        $region33: #{tpu_custom_call.1} parent=27 // pred_check
          %p274 = pneg %p273
        $region34: #{tpu_custom_call.1} parent=27 // pred_check_branch
          %276 = sbr.rel (%p274) target = $region36
        $region35: #{tpu_custom_call.1} parent=27 // pred_region
          %v277 = vld [vmem:[#allocation2] sm:$0x1]
          %v279 = vlaneseq
          %v280 = vshrl.u32 %v279, 7
          %v281 = vsub.s32 0, %v280
          %v282 = vrot.slane %v277, %v281
          %283 = vset.pattern.permute.xlu0 0
          %284 = vperm.xlu0 %283, %v282
          %v285 = vpop.permute.xlu0 %284
          %v287 = vadd.f32 %v285, 0.0
          %288 = vst [vmem:[%s199] sm:$0xff] %v287
        $region36: #{tpu_custom_call.1} parent=27 // pred_fallthru
          _
        %s289 = sand.u32 %s104, 1
        %s290 = scalar_lea.sflag [#allocation5], %s289
        %s291 = sand.u32 %s104, 1
        %s292 = smul.addr %s291, 8
        %s293 = scalar_lea.vmem [#allocation4], %s292
        // Predicated region
        $region37: #{tpu_custom_call.1} parent=27 // pred_check
          %p294 = pneg %p114
        $region38: #{tpu_custom_call.1} parent=27 // pred_check_branch
          %296 = sbr.rel (%p294) target = $region40
        $region39: #{tpu_custom_call.1} parent=27 // pred_region
          %s298 = ssub.s32 128, 128
          %299 = vsyncadd %s290, %s298
          %s300 = smul.addr %s20, 128
          %s301 = scalar_lea.hbm %s2, %s300
          %s303 = sshll.u32 %s293, 4
          %s304 = int_to_ptr.vmem [resolvable:$true] %s303
          %306 = dma.vmem_to_hbm [thread:$0]  %s304, 128, %s301, %s290
        $region40: #{tpu_custom_call.1} parent=27 // pred_fallthru
          _
      $region28: #{tpu_custom_call.1} parent=5 // pred_fallthru
        _
      %p307 = scmp.le.s32.totalorder 2, %s11
      // Predicated region
      $region41: #{tpu_custom_call.1} parent=5 // pred_check
        %p308 = pneg %p307
      $region42: #{tpu_custom_call.1} parent=5 // pred_check_branch
        %310 = sbr.rel (%p308) target = $region44
      $region43: #{tpu_custom_call.1} parent=5 // pred_region
        %s311 = ssub.s32 %s11, 2
        // Predicated region
        $region45: #{tpu_custom_call.1} parent=43 // pred_check
          %p312 = pneg %p120
        $region46: #{tpu_custom_call.1} parent=43 // pred_check_branch
          %314 = sbr.rel (%p312) target = $region48
        $region47: #{tpu_custom_call.1} parent=43 // pred_region
          %s315 = sand.u32 %s105, 1
          %s316 = scalar_lea.sflag [#allocation5], %s315
          %s317 = sand.u32 %s105, 1
          %s318 = smul.addr %s317, 8
          %s319 = scalar_lea.vmem [#allocation4], %s318
          %320 = dma.done %s316, 128
        $region48: #{tpu_custom_call.1} parent=43 // pred_fallthru
          _
      $region44: #{tpu_custom_call.1} parent=5 // pred_fallthru
        _
    $region6: #{tpu_custom_call.1} parent=1 // loop_footer
      %s15 = sadd.s32 1, %s11
    $region7: #{tpu_custom_call.1} parent=1 // loop_footer_branch
      %10 = sbr.rel target = $region3
    $region8: #{tpu_custom_call.1} parent=1 // loop_exit
      _
    %321 = vsyncpa [#allocation5], 1
    %s322 = scalar_lea.sflag [#allocation5], 1
    %323 = vsyncpa %s322, 1

</llo_original>
